<compile_context>
chip_gen: v7x
topology: tpu7x:2x2x1
jax: 0.10.0
libtpu: 0.0.40
codegen_flags: <defaults>
</compile_context>

<pallas_src>
import functools

import jax
import jax.numpy as jnp
from jax.experimental import pallas as pl
from jax.experimental.pallas import tpu as pltpu


def _sym_loss_kernel(planes_ref, points_ref, table_ref, out_ref, *,
                     size, n_planes, batch_tile):
    # planes_ref: [Bt, 4, P]   rows = (nx, ny, nz, d), one column per plane
    # points_ref: [Bt, 3, N]   channel-minor: x/y/z rows, points on lanes
    # table_ref:  [Bt, 4, S^3] rows = (pre_x, pre_y, pre_z, voxel)
    n_pts = points_ref.shape[2]
    s3 = table_ref.shape[2]

    # [S^3, 1] sublane iota; the `== g_all` compare broadcasts it to [S^3, 3N]
    # without ever holding the full 2-D iota live (review item 1).
    cell_iota = jax.lax.broadcasted_iota(jnp.int32, (s3, 1), 0)

    # Per-lane partial sums accumulated across planes AND folded batches; a single
    # cross-lane reduction happens once at the very end (review item 3).
    acc = jnp.zeros((1, n_planes * n_pts), jnp.float32)

    for bi in range(batch_tile):          # static unroll (Bt is 1 or B, both tiny)
        planes = planes_ref[bi]           # [4, P]
        points = points_ref[bi]           # [3, N]
        table = table_ref[bi]             # [4, S^3]

        refls = []
        g_idxs = []
        for i in range(n_planes):         # static unroll, P == 3
            n_col = planes[0:3, i:i + 1]                            # [3, 1]
            d_val = planes[3:4, i:i + 1]                            # [1, 1]
            len2 = jnp.sum(n_col * n_col, axis=0, keepdims=True)    # [1, 1]
            # One scalar reciprocal + N-wide multiply instead of an N-wide divide.
            # approx=False: an approximate rcp could flip a truncated cell index.
            inv_len2 = pl.reciprocal(len2, approx=False)

            # tran_plane: reflect points across plane  n.x + d = 0
            t = (jnp.sum(points * n_col, axis=0, keepdims=True) + d_val) * inv_len2
            refl = points - 2.0 * t * n_col                          # [3, N]

            # get_point_cells: (p+0.5)*size, truncate toward zero, clamp [0, size-1]
            cells = ((refl + 0.5) * size).astype(jnp.int32)
            cells = jnp.clip(cells, 0, size - 1)
            g_idx = (cells[0:1, :] * (size * size)
                     + cells[1:2, :] * size
                     + cells[2:3, :])                                # [1, N] int32

            refls.append(refl)
            g_idxs.append(g_idx)

        # Fused gather for all planes with ONE MXU matmul (review item 2):
        #   one-hot [S^3, 3N] (exact 0/1 weights), table [4, S^3] -> [4, 3N]
        g_all = jnp.concatenate(g_idxs, axis=1)                      # [1, 3N]
        refl_all = jnp.concatenate(refls, axis=1)                    # [3, 3N]
        onehot = (cell_iota == g_all).astype(jnp.float32)            # [S^3, 3N]
        gathered = jnp.dot(table, onehot,
                           preferred_element_type=jnp.float32)       # [4, 3N]
        target = gathered[0:3, :]                                    # [3, 3N]
        occ = gathered[3:4, :]                                       # [1, 3N]

        # pairwise_distance(p=2, eps=1e-6): || x1 - x2 + eps ||_2
        diff = refl_all - target + 1e-6
        dist = jnp.sqrt(jnp.sum(diff * diff, axis=0, keepdims=True))  # [1, 3N]
        acc = acc + dist * (1.0 - occ)

    # Single XLU cross-lane reduce per grid step.
    out_ref[...] = jnp.sum(acc, axis=1, keepdims=True).reshape(1, 1, 1)


def loss_func_pallas(sample_points, pretreatment, voxel, planes, *, size, Wr,
                     batch_tile=1):
    """Pallas equivalent of LossFunc.forward.

    batch_tile: number of batches folded into one grid step.  Use 1 on dual-TC
    chips (v7x) so the "parallel" batch axis keeps both cores busy; use B on
    single-TC chips (v5e / v6e) to amortize per-step pipeline overhead.
    """
    B, N, _ = sample_points.shape
    P = len(planes)
    S3 = size ** 3
    assert B % batch_tile == 0
    n_steps = B // batch_tile

    planes_stacked = jnp.stack(planes, axis=1).astype(jnp.float32)      # [B, P, 4]

    # Lane-dense, channel-minor layouts (layout plumbing done by XLA in the wrapper).
    # TODO(synk): if pretreatment/voxel are reused across many calls, hoist this
    # table construction out of the per-call wrapper to avoid an extra HBM pass.
    planes_t = jnp.swapaxes(planes_stacked, 1, 2)                       # [B, 4, P]
    points_t = jnp.swapaxes(sample_points.astype(jnp.float32), 1, 2)    # [B, 3, N]
    pre_flat = pretreatment.reshape(B, S3, 3).astype(jnp.float32)
    vox_flat = voxel.reshape(B, S3, 1).astype(jnp.float32)
    table = jnp.swapaxes(jnp.concatenate([pre_flat, vox_flat], axis=2),
                         1, 2)                                          # [B, 4, S^3]

    kernel = functools.partial(_sym_loss_kernel, size=size, n_planes=P,
                               batch_tile=batch_tile)

    # NOTE: the fused [S^3, 3N] one-hot is the largest per-step intermediate
    # (S^3 * 3N * 4 B per folded batch).  When N or size scale, add an N-tile
    # grid axis and keep  batch_tile * S^3 * 3 * N_tile * 4 B  (plus double-buffer
    # headroom) under the scoped VMEM limit — 16 MiB default on v5e, 32 MiB on
    # v6e/v7x (v7x physical VMEM is only 64 MiB) — or raise vmem_limit_bytes.
    per_step = pl.pallas_call(
        kernel,
        out_shape=jax.ShapeDtypeStruct((n_steps, 1, 1), jnp.float32),
        grid_spec=pltpu.PrefetchScalarGridSpec(
            num_scalar_prefetch=0,
            grid=(n_steps,),
            in_specs=[
                pl.BlockSpec((batch_tile, 4, P), lambda b: (b, 0, 0)),
                pl.BlockSpec((batch_tile, 3, N), lambda b: (b, 0, 0)),
                pl.BlockSpec((batch_tile, 4, S3), lambda b: (b, 0, 0)),
            ],
            out_specs=pl.BlockSpec((1, 1, 1), lambda b: (b, 0, 0)),
        ),
        compiler_params=pltpu.CompilerParams(
            dimension_semantics=("parallel",)),   # independent per-step outputs
    )(planes_t, points_t, table)

    sym = jnp.sum(per_step) / B

    # calc_reg_loss: tiny per-batch 3x3 computation — cheaper as a plain XLA op
    # than as padded MXU/XLU work inside the kernel epilogue.
    nvecs = planes_stacked[:, :, 0:3]                                   # [B, 3, 3]
    norms = jnp.sqrt(jnp.sum(nvecs * nvecs, axis=2, keepdims=True))
    m1 = nvecs / jnp.maximum(norms, 1e-12)                              # F.normalize
    M = m1 * jnp.swapaxes(m1, 1, 2)                                     # requires P == 3
    reg = jnp.sum((M - jnp.eye(3, dtype=jnp.float32)) ** 2) / B

    return sym + Wr * reg


def loss_func_ref(sample_points, pretreatment, voxel, planes, *, size, Wr):
    """Pure-JAX reference following the PyTorch semantics exactly."""
    B, N, _ = sample_points.shape
    S3 = size ** 3
    pre_flat = pretreatment.reshape(B, S3, 3)
    vox_flat = voxel.reshape(B, S3)

    # calc_reg_loss
    m1 = jnp.stack(
        [p[:, 0:3] / jnp.maximum(
            jnp.linalg.norm(p[:, 0:3], axis=1, keepdims=True), 1e-12)
         for p in planes], axis=1)                                     # [B, P, 3]
    M = m1 * jnp.swapaxes(m1, 1, 2)                                    # P must be 3
    reg = jnp.sum((M - jnp.eye(3, dtype=jnp.float32)) ** 2) / B

    sym = jnp.float32(0.0)
    for p in planes:
        n = p[:, 0:3]
        d = p[:, 3]
        len2 = jnp.sum(n * n, axis=1)
        t = (jnp.sum(sample_points * n[:, None, :], axis=2) + d[:, None]) / len2[:, None]
        refl = sample_points - 2.0 * t[:, :, None] * n[:, None, :]
        cells = ((refl + 0.5) * size).astype(jnp.int32)
        cells = jnp.where(cells >= size, size - 1, cells)
        cells = jnp.where(cells < 0, 0, cells)
        g = cells[..., 0] * size * size + cells[..., 1] * size + cells[..., 2]
        target = jnp.take_along_axis(pre_flat, g[..., None], axis=1)   # [B, N, 3]
        useless = 1.0 - jnp.take_along_axis(vox_flat, g, axis=1)       # [B, N]
        dist = jnp.sqrt(jnp.sum((refl - target + 1e-6) ** 2, axis=2))
        sym = sym + jnp.sum(dist * useless) / B
    return sym + Wr * reg


if __name__ == "__main__":
    B, N, size, P, Wr = 2, 64, 8, 3, 25

    key = jax.random.PRNGKey(0)
    k1, k2, k3, k4 = jax.random.split(key, 4)
    sample_points = jax.random.uniform(k1, (B, N, 3), jnp.float32, -0.5, 0.5)
    pretreatment = jax.random.uniform(k2, (B, size, size, size, 3), jnp.float32, -0.5, 0.5)
    voxel = (jax.random.uniform(k3, (B, size, size, size), jnp.float32) > 0.5
             ).astype(jnp.float32)
    plane_keys = jax.random.split(k4, P)
    planes = [jax.random.normal(pk, (B, 4), jnp.float32) for pk in plane_keys]

    # Batch folding heuristic: single-TC chips (v5e / v6e) -> fold all batches
    # into one grid step; dual-TC v7x (or unknown) -> keep per-batch parallel grid.
    try:
        kind = jax.devices()[0].device_kind.lower()
    except Exception:
        kind = ""
    batch_tile = B if ("v5" in kind or "v6" in kind) else 1

    out = loss_func_pallas(sample_points, pretreatment, voxel, planes,
                           size=size, Wr=Wr, batch_tile=batch_tile)
    out = jax.block_until_ready(out)

    ref = loss_func_ref(sample_points, pretreatment, voxel, planes, size=size, Wr=Wr)
    ref = jax.block_until_ready(ref)

    assert abs(float(out) - float(ref)) <= 1e-3 * max(1.0, abs(float(ref))), (
        float(out), float(ref))
    print("KERNEL_OK")
</pallas_src>

<mosaic_0001>
module attributes {stable_mosaic.version = 11 : i64} {
  func.func @_sym_loss_kernel(%arg0: i32, %arg1: memref<1x4x3xf32, #tpu.memory_space<vmem>>, %arg2: memref<1x3x64xf32, #tpu.memory_space<vmem>>, %arg3: memref<1x4x512xf32, #tpu.memory_space<vmem>>, %arg4: memref<1x1x1xf32, #tpu.memory_space<vmem>>) attributes {dimension_semantics = [#tpu.dimension_semantics<parallel>], iteration_bounds = array<i64: 2>, scalar_prefetch = 0 : i64, scratch_operands = 0 : i64, tpu.core_type = #tpu.core_type<tc>, window_params = [{transform_indices = @transform_0, window_bounds = array<i64: 1, 4, 3>}, {transform_indices = @transform_1, window_bounds = array<i64: 1, 3, 64>}, {transform_indices = @transform_2, window_bounds = array<i64: 1, 4, 512>}, {transform_indices = @transform_3, window_bounds = array<i64: 1, 1, 1>}]} {
    %0 = tpu.iota {dimensions = array<i32: 0>} : vector<512x1xi32>
    %cst = arith.constant 0.000000e+00 : f32
    %1 = vector.broadcast %cst : f32 to vector<1x192xf32>
    %c0 = arith.constant 0 : index
    %c0_0 = arith.constant 0 : index
    %c0_1 = arith.constant 0 : index
    %2 = vector.load %arg1[%c0, %c0_0, %c0_1] : memref<1x4x3xf32, #tpu.memory_space<vmem>>, vector<1x4x3xf32>
    %3 = vector.shape_cast %2 : vector<1x4x3xf32> to vector<4x3xf32>
    %c0_2 = arith.constant 0 : index
    %c0_3 = arith.constant 0 : index
    %c0_4 = arith.constant 0 : index
    %4 = vector.load %arg2[%c0_2, %c0_3, %c0_4] : memref<1x3x64xf32, #tpu.memory_space<vmem>>, vector<1x3x64xf32>
    %5 = vector.shape_cast %4 : vector<1x3x64xf32> to vector<3x64xf32>
    %c0_5 = arith.constant 0 : index
    %c0_6 = arith.constant 0 : index
    %c0_7 = arith.constant 0 : index
    %6 = vector.load %arg3[%c0_5, %c0_6, %c0_7] : memref<1x4x512xf32, #tpu.memory_space<vmem>>, vector<1x4x512xf32>
    %7 = vector.shape_cast %6 : vector<1x4x512xf32> to vector<4x512xf32>
    %8 = vector.extract_strided_slice %3 {offsets = [0, 0], sizes = [3, 1], strides = [1, 1]} : vector<4x3xf32> to vector<3x1xf32>
    %9 = vector.extract_strided_slice %3 {offsets = [3, 0], sizes = [1, 1], strides = [1, 1]} : vector<4x3xf32> to vector<1x1xf32>
    %10 = arith.mulf %8, %8 : vector<3x1xf32>
    %cst_8 = arith.constant dense<0.000000e+00> : vector<1xf32>
    %11 = vector.multi_reduction <add>, %10, %cst_8 [0] : vector<3x1xf32> to vector<1xf32>
    %12 = vector.shape_cast %11 : vector<1xf32> to vector<1x1xf32>
    %13 = tpu.reciprocal %12 : vector<1x1xf32> -> vector<1x1xf32>
    %14 = vector.broadcast %8 : vector<3x1xf32> to vector<3x64xf32>
    %15 = arith.mulf %5, %14 : vector<3x64xf32>
    %cst_9 = arith.constant dense<0.000000e+00> : vector<64xf32>
    %16 = vector.multi_reduction <add>, %15, %cst_9 [0] : vector<3x64xf32> to vector<64xf32>
    %17 = vector.shape_cast %16 : vector<64xf32> to vector<1x64xf32>
    %18 = vector.broadcast %9 : vector<1x1xf32> to vector<1x64xf32>
    %19 = arith.addf %17, %18 : vector<1x64xf32>
    %20 = vector.broadcast %13 : vector<1x1xf32> to vector<1x64xf32>
    %21 = arith.mulf %19, %20 : vector<1x64xf32>
    %cst_10 = arith.constant 2.000000e+00 : f32
    %22 = vector.broadcast %cst_10 : f32 to vector<1x64xf32>
    %23 = arith.mulf %22, %21 : vector<1x64xf32>
    %24 = vector.broadcast %23 : vector<1x64xf32> to vector<3x64xf32>
    %25 = vector.broadcast %8 : vector<3x1xf32> to vector<3x64xf32>
    %26 = arith.mulf %24, %25 : vector<3x64xf32>
    %27 = arith.subf %5, %26 : vector<3x64xf32>
    %cst_11 = arith.constant 5.000000e-01 : f32
    %28 = vector.broadcast %cst_11 : f32 to vector<3x64xf32>
    %29 = arith.addf %27, %28 : vector<3x64xf32>
    %cst_12 = arith.constant 8.000000e+00 : f32
    %30 = vector.broadcast %cst_12 : f32 to vector<3x64xf32>
    %31 = arith.mulf %29, %30 : vector<3x64xf32>
    %32 = arith.fptosi %31 : vector<3x64xf32> to vector<3x64xi32>
    %c0_i32 = arith.constant 0 : i32
    %c7_i32 = arith.constant 7 : i32
    %33 = vector.broadcast %c0_i32 : i32 to vector<3x64xi32>
    %34 = arith.maxsi %33, %32 : vector<3x64xi32>
    %35 = vector.broadcast %c7_i32 : i32 to vector<3x64xi32>
    %36 = arith.minsi %35, %34 : vector<3x64xi32>
    %37 = vector.extract_strided_slice %36 {offsets = [0, 0], sizes = [1, 64], strides = [1, 1]} : vector<3x64xi32> to vector<1x64xi32>
    %c64_i32 = arith.constant 64 : i32
    %38 = vector.broadcast %c64_i32 : i32 to vector<1x64xi32>
    %39 = arith.muli %37, %38 : vector<1x64xi32>
    %40 = vector.extract_strided_slice %36 {offsets = [1, 0], sizes = [1, 64], strides = [1, 1]} : vector<3x64xi32> to vector<1x64xi32>
    %c8_i32 = arith.constant 8 : i32
    %41 = vector.broadcast %c8_i32 : i32 to vector<1x64xi32>
    %42 = arith.muli %40, %41 : vector<1x64xi32>
    %43 = arith.addi %39, %42 : vector<1x64xi32>
    %44 = vector.extract_strided_slice %36 {offsets = [2, 0], sizes = [1, 64], strides = [1, 1]} : vector<3x64xi32> to vector<1x64xi32>
    %45 = arith.addi %43, %44 : vector<1x64xi32>
    %46 = vector.extract_strided_slice %3 {offsets = [0, 1], sizes = [3, 1], strides = [1, 1]} : vector<4x3xf32> to vector<3x1xf32>
    %47 = vector.extract_strided_slice %3 {offsets = [3, 1], sizes = [1, 1], strides = [1, 1]} : vector<4x3xf32> to vector<1x1xf32>
    %48 = arith.mulf %46, %46 : vector<3x1xf32>
    %cst_13 = arith.constant dense<0.000000e+00> : vector<1xf32>
    %49 = vector.multi_reduction <add>, %48, %cst_13 [0] : vector<3x1xf32> to vector<1xf32>
    %50 = vector.shape_cast %49 : vector<1xf32> to vector<1x1xf32>
    %51 = tpu.reciprocal %50 : vector<1x1xf32> -> vector<1x1xf32>
    %52 = vector.broadcast %46 : vector<3x1xf32> to vector<3x64xf32>
    %53 = arith.mulf %5, %52 : vector<3x64xf32>
    %cst_14 = arith.constant dense<0.000000e+00> : vector<64xf32>
    %54 = vector.multi_reduction <add>, %53, %cst_14 [0] : vector<3x64xf32> to vector<64xf32>
    %55 = vector.shape_cast %54 : vector<64xf32> to vector<1x64xf32>
    %56 = vector.broadcast %47 : vector<1x1xf32> to vector<1x64xf32>
    %57 = arith.addf %55, %56 : vector<1x64xf32>
    %58 = vector.broadcast %51 : vector<1x1xf32> to vector<1x64xf32>
    %59 = arith.mulf %57, %58 : vector<1x64xf32>
    %cst_15 = arith.constant 2.000000e+00 : f32
    %60 = vector.broadcast %cst_15 : f32 to vector<1x64xf32>
    %61 = arith.mulf %60, %59 : vector<1x64xf32>
    %62 = vector.broadcast %61 : vector<1x64xf32> to vector<3x64xf32>
    %63 = vector.broadcast %46 : vector<3x1xf32> to vector<3x64xf32>
    %64 = arith.mulf %62, %63 : vector<3x64xf32>
    %65 = arith.subf %5, %64 : vector<3x64xf32>
    %cst_16 = arith.constant 5.000000e-01 : f32
    %66 = vector.broadcast %cst_16 : f32 to vector<3x64xf32>
    %67 = arith.addf %65, %66 : vector<3x64xf32>
    %cst_17 = arith.constant 8.000000e+00 : f32
    %68 = vector.broadcast %cst_17 : f32 to vector<3x64xf32>
    %69 = arith.mulf %67, %68 : vector<3x64xf32>
    %70 = arith.fptosi %69 : vector<3x64xf32> to vector<3x64xi32>
    %c0_i32_18 = arith.constant 0 : i32
    %c7_i32_19 = arith.constant 7 : i32
    %71 = vector.broadcast %c0_i32_18 : i32 to vector<3x64xi32>
    %72 = arith.maxsi %71, %70 : vector<3x64xi32>
    %73 = vector.broadcast %c7_i32_19 : i32 to vector<3x64xi32>
    %74 = arith.minsi %73, %72 : vector<3x64xi32>
    %75 = vector.extract_strided_slice %74 {offsets = [0, 0], sizes = [1, 64], strides = [1, 1]} : vector<3x64xi32> to vector<1x64xi32>
    %c64_i32_20 = arith.constant 64 : i32
    %76 = vector.broadcast %c64_i32_20 : i32 to vector<1x64xi32>
    %77 = arith.muli %75, %76 : vector<1x64xi32>
    %78 = vector.extract_strided_slice %74 {offsets = [1, 0], sizes = [1, 64], strides = [1, 1]} : vector<3x64xi32> to vector<1x64xi32>
    %c8_i32_21 = arith.constant 8 : i32
    %79 = vector.broadcast %c8_i32_21 : i32 to vector<1x64xi32>
    %80 = arith.muli %78, %79 : vector<1x64xi32>
    %81 = arith.addi %77, %80 : vector<1x64xi32>
    %82 = vector.extract_strided_slice %74 {offsets = [2, 0], sizes = [1, 64], strides = [1, 1]} : vector<3x64xi32> to vector<1x64xi32>
    %83 = arith.addi %81, %82 : vector<1x64xi32>
    %84 = vector.extract_strided_slice %3 {offsets = [0, 2], sizes = [3, 1], strides = [1, 1]} : vector<4x3xf32> to vector<3x1xf32>
    %85 = vector.extract_strided_slice %3 {offsets = [3, 2], sizes = [1, 1], strides = [1, 1]} : vector<4x3xf32> to vector<1x1xf32>
    %86 = arith.mulf %84, %84 : vector<3x1xf32>
    %cst_22 = arith.constant dense<0.000000e+00> : vector<1xf32>
    %87 = vector.multi_reduction <add>, %86, %cst_22 [0] : vector<3x1xf32> to vector<1xf32>
    %88 = vector.shape_cast %87 : vector<1xf32> to vector<1x1xf32>
    %89 = tpu.reciprocal %88 : vector<1x1xf32> -> vector<1x1xf32>
    %90 = vector.broadcast %84 : vector<3x1xf32> to vector<3x64xf32>
    %91 = arith.mulf %5, %90 : vector<3x64xf32>
    %cst_23 = arith.constant dense<0.000000e+00> : vector<64xf32>
    %92 = vector.multi_reduction <add>, %91, %cst_23 [0] : vector<3x64xf32> to vector<64xf32>
    %93 = vector.shape_cast %92 : vector<64xf32> to vector<1x64xf32>
    %94 = vector.broadcast %85 : vector<1x1xf32> to vector<1x64xf32>
    %95 = arith.addf %93, %94 : vector<1x64xf32>
    %96 = vector.broadcast %89 : vector<1x1xf32> to vector<1x64xf32>
    %97 = arith.mulf %95, %96 : vector<1x64xf32>
    %cst_24 = arith.constant 2.000000e+00 : f32
    %98 = vector.broadcast %cst_24 : f32 to vector<1x64xf32>
    %99 = arith.mulf %98, %97 : vector<1x64xf32>
    %100 = vector.broadcast %99 : vector<1x64xf32> to vector<3x64xf32>
    %101 = vector.broadcast %84 : vector<3x1xf32> to vector<3x64xf32>
    %102 = arith.mulf %100, %101 : vector<3x64xf32>
    %103 = arith.subf %5, %102 : vector<3x64xf32>
    %cst_25 = arith.constant 5.000000e-01 : f32
    %104 = vector.broadcast %cst_25 : f32 to vector<3x64xf32>
    %105 = arith.addf %103, %104 : vector<3x64xf32>
    %cst_26 = arith.constant 8.000000e+00 : f32
    %106 = vector.broadcast %cst_26 : f32 to vector<3x64xf32>
    %107 = arith.mulf %105, %106 : vector<3x64xf32>
    %108 = arith.fptosi %107 : vector<3x64xf32> to vector<3x64xi32>
    %c0_i32_27 = arith.constant 0 : i32
    %c7_i32_28 = arith.constant 7 : i32
    %109 = vector.broadcast %c0_i32_27 : i32 to vector<3x64xi32>
    %110 = arith.maxsi %109, %108 : vector<3x64xi32>
    %111 = vector.broadcast %c7_i32_28 : i32 to vector<3x64xi32>
    %112 = arith.minsi %111, %110 : vector<3x64xi32>
    %113 = vector.extract_strided_slice %112 {offsets = [0, 0], sizes = [1, 64], strides = [1, 1]} : vector<3x64xi32> to vector<1x64xi32>
    %c64_i32_29 = arith.constant 64 : i32
    %114 = vector.broadcast %c64_i32_29 : i32 to vector<1x64xi32>
    %115 = arith.muli %113, %114 : vector<1x64xi32>
    %116 = vector.extract_strided_slice %112 {offsets = [1, 0], sizes = [1, 64], strides = [1, 1]} : vector<3x64xi32> to vector<1x64xi32>
    %c8_i32_30 = arith.constant 8 : i32
    %117 = vector.broadcast %c8_i32_30 : i32 to vector<1x64xi32>
    %118 = arith.muli %116, %117 : vector<1x64xi32>
    %119 = arith.addi %115, %118 : vector<1x64xi32>
    %120 = vector.extract_strided_slice %112 {offsets = [2, 0], sizes = [1, 64], strides = [1, 1]} : vector<3x64xi32> to vector<1x64xi32>
    %121 = arith.addi %119, %120 : vector<1x64xi32>
    %122 = tpu.concatenate %45, %83, %121 in 1 : vector<1x64xi32>, vector<1x64xi32>, vector<1x64xi32> -> vector<1x192xi32>
    %123 = tpu.concatenate %27, %65, %103 in 1 : vector<3x64xf32>, vector<3x64xf32>, vector<3x64xf32> -> vector<3x192xf32>
    %124 = vector.broadcast %0 : vector<512x1xi32> to vector<512x192xi32>
    %125 = vector.broadcast %122 : vector<1x192xi32> to vector<512x192xi32>
    %126 = arith.cmpi eq, %124, %125 : vector<512x192xi32>
    %127 = arith.extui %126 : vector<512x192xi1> to vector<512x192xi32>
    %128 = arith.sitofp %127 : vector<512x192xi32> to vector<512x192xf32>
    %cst_31 = arith.constant dense<0.000000e+00> : vector<4x192xf32>
    %129 = tpu.matmul %7, %128, %cst_31 {dimension_numbers = #tpu.dot_dimension_numbers<[1], [0], [0], [1], [0, 0, 1, 1], [], []>} : vector<4x512xf32>, vector<512x192xf32>, vector<4x192xf32> -> vector<4x192xf32>
    %130 = vector.extract_strided_slice %129 {offsets = [0, 0], sizes = [3, 192], strides = [1, 1]} : vector<4x192xf32> to vector<3x192xf32>
    %131 = vector.extract_strided_slice %129 {offsets = [3, 0], sizes = [1, 192], strides = [1, 1]} : vector<4x192xf32> to vector<1x192xf32>
    %132 = arith.subf %123, %130 : vector<3x192xf32>
    %cst_32 = arith.constant 9.99999997E-7 : f32
    %133 = vector.broadcast %cst_32 : f32 to vector<3x192xf32>
    %134 = arith.addf %132, %133 : vector<3x192xf32>
    %135 = arith.mulf %134, %134 : vector<3x192xf32>
    %cst_33 = arith.constant dense<0.000000e+00> : vector<192xf32>
    %136 = vector.multi_reduction <add>, %135, %cst_33 [0] : vector<3x192xf32> to vector<192xf32>
    %137 = vector.shape_cast %136 : vector<192xf32> to vector<1x192xf32>
    %138 = math.sqrt %137 : vector<1x192xf32>
    %cst_34 = arith.constant 1.000000e+00 : f32
    %139 = vector.broadcast %cst_34 : f32 to vector<1x192xf32>
    %140 = arith.subf %139, %131 : vector<1x192xf32>
    %141 = arith.mulf %138, %140 : vector<1x192xf32>
    %142 = arith.addf %1, %141 : vector<1x192xf32>
    %cst_35 = arith.constant dense<0.000000e+00> : vector<1xf32>
    %143 = vector.multi_reduction <add>, %142, %cst_35 [1] : vector<1x192xf32> to vector<1xf32>
    %144 = vector.shape_cast %143 : vector<1xf32> to vector<1x1xf32>
    %145 = vector.shape_cast %144 : vector<1x1xf32> to vector<1x1x1xf32>
    %c0_36 = arith.constant 0 : index
    %c0_37 = arith.constant 0 : index
    %c0_38 = arith.constant 0 : index
    %146 = vector.load %arg4[%c0_36, %c0_37, %c0_38] : memref<1x1x1xf32, #tpu.memory_space<vmem>>, vector<1x1x1xf32>
    tpu.vector_store %arg4[%c0_36, %c0_37, %c0_38], %145 {strides = array<i32>} : memref<1x1x1xf32, #tpu.memory_space<vmem>>, vector<1x1x1xf32>,
    return
  }
  func.func @transform_0(%arg0: i32) -> (i32, i32, i32) {
    %c0_i32 = arith.constant 0 : i32
    %c0_i32_0 = arith.constant 0 : i32
    %c0_i32_1 = arith.constant 0 : i32
    return %arg0, %c0_i32, %c0_i32_0 : i32, i32, i32
  }
  func.func @transform_1(%arg0: i32) -> (i32, i32, i32) {
    %c0_i32 = arith.constant 0 : i32
    %c0_i32_0 = arith.constant 0 : i32
    %c0_i32_1 = arith.constant 0 : i32
    return %arg0, %c0_i32, %c0_i32_0 : i32, i32, i32
  }
  func.func @transform_2(%arg0: i32) -> (i32, i32, i32) {
    %c0_i32 = arith.constant 0 : i32
    %c0_i32_0 = arith.constant 0 : i32
    %c0_i32_1 = arith.constant 0 : i32
    return %arg0, %c0_i32, %c0_i32_0 : i32, i32, i32
  }
  func.func @transform_3(%arg0: i32) -> (i32, i32, i32) {
    %c0_i32 = arith.constant 0 : i32
    %c0_i32_0 = arith.constant 0 : i32
    %c0_i32_1 = arith.constant 0 : i32
    return %arg0, %c0_i32, %c0_i32_0 : i32, i32, i32
  }
}

</mosaic_0001>

<llo_original>
// kernel: tpu_custom_call.1
$region0: #{tpu_custom_call.1}
  #allocation0 [shape = 'u32[]', space=smem, size = 0x4, offset = 0x4, fixed_abs, tag = 'smem constant byte address 0x4 - core index']
  #allocation1 [shape = 'u32[144,128]{1,0:T(1,128)}', space=vmem, size = 0x12000, scoped, tag = 'internal scratch']
  %s0 = inlined_call_operand.vmem [shape: f32[2,4,3], index: 0, kind: input, shape index: {}]
  %s1 = inlined_call_operand.vmem [shape: f32[2,3,64], index: 1, kind: input, shape index: {}]
  %s2 = inlined_call_operand.vmem [shape: f32[2,4,512], index: 2, kind: input, shape index: {}]
  %s3 = inlined_call_operand.vmem [shape: f32[2,1,1], index: 3, kind: output, shape index: {}]
  %s4 = sld [smem:[#allocation0]]
  $region45: #{tpu_custom_call.1} parent=0
    _
  %s6 = ssub.s32 1, %s4
  %s7 = scalar_select 0, %s6, %s4
  loop: start=0, step=1, limit=4
  $region2: #{tpu_custom_call.1} parent=0 // loop_pre_header
    _
  $region3: #{tpu_custom_call.1} parent=0 // loop_header
    %s9 = sphi 0, %s13
    %p10 = scmp.ge.s32.totalorder %s9, 4
    %s19 = sphi 0, %s21
    %s22 = sphi 0, %s19
    %s23 = sphi 0, %s22
    %s39 = sphi 0, %s23
    %s45 = sphi 0, %s47
    %s48 = sphi 0, %s45
    %s49 = sphi 0, %s48
    %s65 = sphi 0, %s49
    %s71 = sphi 0, %s73
    %s74 = sphi 0, %s71
    %s75 = sphi 0, %s74
    %s91 = sphi 0, %s75
    %s97 = sphi 0, %s99
    %s100 = sphi 0, %s97
    %s101 = sphi 0, %s100
    %s117 = sphi 0, %s101
  $region4: #{tpu_custom_call.1} parent=0 // loop_header_branch
    %12 = sbr.rel (%p10) target = $region8
  $region5: #{tpu_custom_call.1} parent=0 // loop_body
    %s14 = ssub.s32 %s9, 1
    %s15 = ssub.s32 %s9, 2
    %s16 = sadd.s32 %s9, 1
    %s17 = ssub.s32 %s9, %s16
    %p18 = scmp.eq.s32.totalorder %s17, 0
    %s20 = sadd.s32 %s19, 1
    %s21 = scalar_select %p18, %s19, %s20
    %p24 = pneg %p18
    %p25 = scmp.eq.s32.totalorder %s9, 1
    %p26 = por %p24, %p25
    %p27 = scmp.ne.s32.totalorder %s19, %s22
    %p28 = scmp.eq.s32.totalorder %s9, 0
    %p29 = por %p27, %p28
    %p30 = scmp.ne.s32.totalorder %s19, %s22
    %p31 = scmp.eq.s32.totalorder %s14, 1
    %p32 = por %p30, %p31
    %p33 = scmp.ne.s32.totalorder %s22, %s23
    %p34 = scmp.eq.s32.totalorder %s14, 0
    %p35 = por %p33, %p34
    %p36 = scmp.ne.s32.totalorder %s22, %s23
    %p37 = scmp.eq.s32.totalorder %s15, 1
    %p38 = por %p36, %p37
    %p40 = scmp.ne.s32.totalorder %s23, %s39
    %p41 = scmp.eq.s32.totalorder %s15, 0
    %p42 = por %p40, %p41
    %s43 = ssub.s32 %s9, %s16
    %p44 = scmp.eq.s32.totalorder %s43, 0
    %s46 = sadd.s32 %s45, 1
    %s47 = scalar_select %p44, %s45, %s46
    %p50 = pneg %p44
    %p51 = scmp.eq.s32.totalorder %s9, 1
    %p52 = por %p50, %p51
    %p53 = scmp.ne.s32.totalorder %s45, %s48
    %p54 = scmp.eq.s32.totalorder %s9, 0
    %p55 = por %p53, %p54
    %p56 = scmp.ne.s32.totalorder %s45, %s48
    %p57 = scmp.eq.s32.totalorder %s14, 1
    %p58 = por %p56, %p57
    %p59 = scmp.ne.s32.totalorder %s48, %s49
    %p60 = scmp.eq.s32.totalorder %s14, 0
    %p61 = por %p59, %p60
    %p62 = scmp.ne.s32.totalorder %s48, %s49
    %p63 = scmp.eq.s32.totalorder %s15, 1
    %p64 = por %p62, %p63
    %p66 = scmp.ne.s32.totalorder %s49, %s65
    %p67 = scmp.eq.s32.totalorder %s15, 0
    %p68 = por %p66, %p67
    %s69 = ssub.s32 %s9, %s16
    %p70 = scmp.eq.s32.totalorder %s69, 0
    %s72 = sadd.s32 %s71, 1
    %s73 = scalar_select %p70, %s71, %s72
    %p76 = pneg %p70
    %p77 = scmp.eq.s32.totalorder %s9, 1
    %p78 = por %p76, %p77
    %p79 = scmp.ne.s32.totalorder %s71, %s74
    %p80 = scmp.eq.s32.totalorder %s9, 0
    %p81 = por %p79, %p80
    %p82 = scmp.ne.s32.totalorder %s71, %s74
    %p83 = scmp.eq.s32.totalorder %s14, 1
    %p84 = por %p82, %p83
    %p85 = scmp.ne.s32.totalorder %s74, %s75
    %p86 = scmp.eq.s32.totalorder %s14, 0
    %p87 = por %p85, %p86
    %p88 = scmp.ne.s32.totalorder %s74, %s75
    %p89 = scmp.eq.s32.totalorder %s15, 1
    %p90 = por %p88, %p89
    %p92 = scmp.ne.s32.totalorder %s75, %s91
    %p93 = scmp.eq.s32.totalorder %s15, 0
    %p94 = por %p92, %p93
    %s95 = ssub.s32 %s9, %s16
    %p96 = scmp.eq.s32.totalorder %s95, 0
    %s98 = sadd.s32 %s97, 1
    %s99 = scalar_select %p96, %s97, %s98
    %p102 = pneg %p96
    %p103 = scmp.eq.s32.totalorder %s9, 1
    %p104 = por %p102, %p103
    %p105 = scmp.ne.s32.totalorder %s97, %s100
    %p106 = scmp.eq.s32.totalorder %s9, 0
    %p107 = por %p105, %p106
    %p108 = scmp.ne.s32.totalorder %s97, %s100
    %p109 = scmp.eq.s32.totalorder %s14, 1
    %p110 = por %p108, %p109
    %p111 = scmp.ne.s32.totalorder %s100, %s101
    %p112 = scmp.eq.s32.totalorder %s14, 0
    %p113 = por %p111, %p112
    %p114 = scmp.ne.s32.totalorder %s100, %s101
    %p115 = scmp.eq.s32.totalorder %s15, 1
    %p116 = por %p114, %p115
    %p118 = scmp.ne.s32.totalorder %s101, %s117
    %p119 = scmp.eq.s32.totalorder %s15, 0
    %p120 = por %p118, %p119
    %p121 = scmp.le.s32.totalorder 1, %s9
    %p122 = scmp.lt.s32.totalorder %s9, 3
    %p123 = pnand %p121, %p122
    %p124 = pneg %p123
    // Predicated region
    $region9: #{tpu_custom_call.1} parent=5 // pred_check
      _
    $region10: #{tpu_custom_call.1} parent=5 // pred_check_branch
      %126 = sbr.rel (%p123) target = $region12
    $region11: #{tpu_custom_call.1} parent=5 // pred_region
      %s127 = ssub.s32 %s9, 1
    $region12: #{tpu_custom_call.1} parent=5 // pred_fallthru
      _
    %p128 = scmp.lt.s32.totalorder %s9, 2
    // Predicated region
    $region13: #{tpu_custom_call.1} parent=5 // pred_check
      %p129 = pneg %p128
    $region14: #{tpu_custom_call.1} parent=5 // pred_check_branch
      %131 = sbr.rel (%p129) target = $region16
    $region15: #{tpu_custom_call.1} parent=5 // pred_region
      // Predicated region
      $region17: #{tpu_custom_call.1} parent=15 // pred_check
        %p132 = pneg %p29
      $region18: #{tpu_custom_call.1} parent=15 // pred_check_branch
        %134 = sbr.rel (%p132) target = $region20
      $region19: #{tpu_custom_call.1} parent=15 // pred_region
        %p135 = scmp.lt.s32.totalorder %s9, 1
        %s136 = scalar_select %p135, %s9, 1
        %s137 = smul.addr %s136, 4
        %s138 = scalar_lea.vmem %s0, %s137
      $region20: #{tpu_custom_call.1} parent=15 // pred_fallthru
        _
      // Predicated region
      $region21: #{tpu_custom_call.1} parent=15 // pred_check
        %p139 = pneg %p55
      $region22: #{tpu_custom_call.1} parent=15 // pred_check_branch
        %141 = sbr.rel (%p139) target = $region24
      $region23: #{tpu_custom_call.1} parent=15 // pred_region
        %p142 = scmp.lt.s32.totalorder %s9, 1
        %s143 = scalar_select %p142, %s9, 1
        %s144 = smul.addr %s143, 4
        %s145 = scalar_lea.vmem %s1, %s144
      $region24: #{tpu_custom_call.1} parent=15 // pred_fallthru
        _
      // Predicated region
      $region25: #{tpu_custom_call.1} parent=15 // pred_check
        %p146 = pneg %p81
      $region26: #{tpu_custom_call.1} parent=15 // pred_check_branch
        %148 = sbr.rel (%p146) target = $region28
      $region27: #{tpu_custom_call.1} parent=15 // pred_region
        %p149 = scmp.lt.s32.totalorder %s9, 1
        %s150 = scalar_select %p149, %s9, 1
        %s151 = smul.addr %s150, 4
        %s152 = smul.addr %s151, 4
        %s153 = scalar_lea.vmem %s2, %s152
      $region28: #{tpu_custom_call.1} parent=15 // pred_fallthru
        _
    $region16: #{tpu_custom_call.1} parent=5 // pred_fallthru
      _
    %p154 = scmp.le.s32.totalorder 1, %s9
    %p155 = scmp.lt.s32.totalorder %s9, 3
    %p156 = pnand %p154, %p155
    %p157 = pneg %p156
    // Predicated region
    $region29: #{tpu_custom_call.1} parent=5 // pred_check
      _
    $region30: #{tpu_custom_call.1} parent=5 // pred_check_branch
      %159 = sbr.rel (%p156) target = $region32
    $region31: #{tpu_custom_call.1} parent=5 // pred_region
      %s160 = ssub.s32 %s9, 1
      %p161 = scmp.lt.s32.totalorder %s14, 1
      %s162 = scalar_select %p161, %s14, 1
      %s163 = smul.addr %s162, 4
      %s164 = scalar_lea.vmem %s0, %s163
      %p165 = pneg %p35
      %p166 = pneg %p32
      %p167 = scmp.lt.s32.totalorder %s14, 1
      %s168 = scalar_select %p167, %s14, 1
      %s169 = smul.addr %s168, 4
      %s170 = scalar_lea.vmem %s1, %s169
      %p171 = pneg %p61
      %p172 = pneg %p58
      %p173 = scmp.lt.s32.totalorder %s14, 1
      %s174 = scalar_select %p173, %s14, 1
      %s175 = smul.addr %s174, 4
      %s176 = smul.addr %s175, 4
      %s177 = scalar_lea.vmem %s2, %s176
      %p178 = pneg %p87
      %p179 = pneg %p84
      %p180 = pneg %p113
      %p181 = pneg %p110
      %p182 = scmp.lt.s32.totalorder %s14, 1
      %s183 = scalar_select %p182, %s14, 1
      %s184 = scalar_lea.vmem %s3, %s183
      %p185 = scmp.lt.s32.totalorder %s14, 1
      %s186 = scalar_select %p185, %s14, 1
      %s187 = smul.addr %s186, 4
      %s188 = scalar_lea.vmem %s0, %s187
      %p189 = scmp.lt.s32.totalorder %s14, 1
      %s190 = scalar_select %p189, %s14, 1
      %s191 = smul.addr %s190, 4
      %s192 = scalar_lea.vmem %s1, %s191
      %p193 = scmp.lt.s32.totalorder %s14, 1
      %s194 = scalar_select %p193, %s14, 1
      %s195 = smul.addr %s194, 4
      %s196 = smul.addr %s195, 4
      %s197 = scalar_lea.vmem %s2, %s196
      %p198 = scmp.lt.s32.totalorder %s14, 1
      %s199 = scalar_select %p198, %s14, 1
      %s200 = scalar_lea.vmem %s3, %s199
      %v201 = vlaneseq
      %v202 = vshrl.u32 %v201, 7
      %v203 = vadd.s32 %v202, 8
      %v204 = vadd.s32 %v202, 16
      %v205 = vadd.s32 %v202, 24
      %v206 = vadd.s32 %v202, 32
      %v207 = vadd.s32 %v202, 40
      %v208 = vadd.s32 %v202, 48
      %v209 = vadd.s32 %v202, 56
      %v210 = vadd.s32 %v202, 64
      %v211 = vadd.s32 %v202, 72
      %v212 = vadd.s32 %v202, 80
      %v213 = vadd.s32 %v202, 88
      %v214 = vadd.s32 %v202, 96
      %v215 = vadd.s32 %v202, 104
      %v216 = vadd.s32 %v202, 112
      %v217 = vadd.s32 %v202, 120
      %v218 = vadd.s32 %v202, 128
      %v219 = vadd.s32 %v202, 136
      %v220 = vadd.s32 %v202, 144
      %v221 = vadd.s32 %v202, 152
      %v222 = vadd.s32 %v202, 160
      %v223 = vadd.s32 %v202, 168
      %v224 = vadd.s32 %v202, 176
      %v225 = vadd.s32 %v202, 184
      %v226 = vadd.s32 %v202, 192
      %v227 = vadd.s32 %v202, 200
      %v228 = vadd.s32 %v202, 208
      %v229 = vadd.s32 %v202, 216
      %v230 = vadd.s32 %v202, 224
      %v231 = vadd.s32 %v202, 232
      %v232 = vadd.s32 %v202, 240
      %v233 = vadd.s32 %v202, 248
      %v234 = vadd.s32 %v202, 256
      %v235 = vadd.s32 %v202, 264
      %v236 = vadd.s32 %v202, 272
      %v237 = vadd.s32 %v202, 280
      %v238 = vadd.s32 %v202, 288
      %v239 = vadd.s32 %v202, 296
      %v240 = vadd.s32 %v202, 304
      %v241 = vadd.s32 %v202, 312
      %v242 = vadd.s32 %v202, 320
      %v243 = vadd.s32 %v202, 328
      %v244 = vadd.s32 %v202, 336
      %v245 = vadd.s32 %v202, 344
      %v246 = vadd.s32 %v202, 352
      %v247 = vadd.s32 %v202, 360
      %v248 = vadd.s32 %v202, 368
      %v249 = vadd.s32 %v202, 376
      %v250 = vadd.s32 %v202, 384
      %v251 = vadd.s32 %v202, 392
      %v252 = vadd.s32 %v202, 400
      %v253 = vadd.s32 %v202, 408
      %v254 = vadd.s32 %v202, 416
      %v255 = vadd.s32 %v202, 424
      %v256 = vadd.s32 %v202, 432
      %v257 = vadd.s32 %v202, 440
      %v258 = vadd.s32 %v202, 448
      %v259 = vadd.s32 %v202, 456
      %v260 = vadd.s32 %v202, 464
      %v261 = vadd.s32 %v202, 472
      %v262 = vadd.s32 %v202, 480
      %v263 = vadd.s32 %v202, 488
      %v264 = vadd.s32 %v202, 496
      %v265 = vadd.s32 %v202, 504
      %v266 = vld [vmem:[%s188] sm:$0xf]
      %v267 = vld [vmem:[%s192] sm:$0x7]
      %v268 = vld [vmem:[%s197] sm:$0xff]
      %v269 = vld [vmem:[%s197 + $0x8] sm:$0xff]
      %v270 = vmul.f32 %v266, %v266
      %vm271 = vcmask 2048
      %v272 = vsel %vm271, %v270, 0.0
      %v273 = vrot.slane %v272, 4
      %v274 = vadd.f32 %v272, %v273
      %v275 = vrot.slane %v274, 2
      %v276 = vadd.f32 %v274, %v275
      %v277 = vrot.slane %v276, 1
      %v278 = vadd.f32 %v276, %v277
      %v279 = vrcp.pop %v278
      %281 = vset.pattern.permute.xlu0 0
      %282 = vperm.xlu0 %281, %v266
      %v283 = vpop.permute.xlu0 %282
      %v285 = vmul.f32 %v267, %v283
      %vm286 = vcmask 518144
      %v287 = vsel %vm286, %v285, 0.0
      %v288 = vrot.slane %v287, 4
      %v289 = vadd.f32 %v287, %v288
      %v290 = vrot.slane %v289, 2
      %v291 = vadd.f32 %v289, %v290
      %v292 = vrot.slane %v291, 1
      %v293 = vadd.f32 %v291, %v292
      %v294 = vadd.f32 %v293, %v283
      %296 = vset.pattern.permute.xlu0 0
      %297 = vperm.xlu0 %296, %v279
      %v298 = vpop.permute.xlu0 %297
      %v300 = vmul.f32 %v294, %v298
      %v301 = vmul.f32 %v300, 2.0
      %v302 = vlaneseq
      %v303 = vshrl.u32 %v302, 7
      %v304 = vsub.s32 3, %v303
      %v305 = vrot.slane %v301, %v304
      %v306 = vmul.f32 %v305, %v283
      %v307 = vsub.f32 %v267, %v306
      %v308 = vadd.f32 %v307, 0.5
      %v309 = vmul.f32 %v308, 8.0
      %v310 = vcvt.f32.s32.to.zero.pseudo %v309
      %vm311 = vcmp.gt.s32.totalorder %v310, 0
      %v312 = vsel %vm311, %v310, 0
      %vm313 = vcmp.lt.s32.totalorder %v312, 7
      %v314 = vsel %vm313, %v312, 7
      %v315 = vmul.u32 %v314, 64
      %v316 = vmul.u32 %v314, 8
      %v317 = vrot.slane %v316, 1
      %v318 = vadd.s32 %v315, %v317
      %v319 = vrot.slane %v314, 2
      %v320 = vadd.s32 %v318, %v319
      %vm321 = vcmask 10248
      %v322 = vsel %vm321, %v270, 0.0
      %v323 = vrot.slane %v322, 4
      %v324 = vadd.f32 %v322, %v323
      %v325 = vrot.slane %v324, 2
      %v326 = vadd.f32 %v324, %v325
      %v327 = vrot.slane %v326, 1
      %v328 = vadd.f32 %v326, %v327
      %v329 = vrcp.pop %v328
      %330 = vset.pattern.permute.xlu0 1
      %331 = vperm.xlu0 %330, %v266
      %v332 = vpop.permute.xlu0 %331
      %v334 = vmul.f32 %v267, %v332
      %v335 = vsel %vm286, %v334, 0.0
      %v336 = vrot.slane %v335, 4
      %v337 = vadd.f32 %v335, %v336
      %v338 = vrot.slane %v337, 2
      %v339 = vadd.f32 %v337, %v338
      %v340 = vrot.slane %v339, 1
      %v341 = vadd.f32 %v339, %v340
      %v342 = vadd.f32 %v341, %v332
      %344 = vset.pattern.permute.xlu0 1
      %345 = vperm.xlu0 %344, %v329
      %v346 = vpop.permute.xlu0 %345
      %v348 = vmul.f32 %v342, %v346
      %v349 = vmul.f32 %v348, 2.0
      %v350 = vlaneseq
      %v351 = vshrl.u32 %v350, 7
      %v352 = vsub.s32 3, %v351
      %v353 = vrot.slane %v349, %v352
      %v354 = vmul.f32 %v353, %v332
      %v355 = vsub.f32 %v267, %v354
      %v356 = vadd.f32 %v355, 0.5
      %v357 = vmul.f32 %v356, 8.0
      %v358 = vcvt.f32.s32.to.zero.pseudo %v357
      %vm359 = vcmp.gt.s32.totalorder %v358, 0
      %v360 = vsel %vm359, %v358, 0
      %vm361 = vcmp.lt.s32.totalorder %v360, 7
      %v362 = vsel %vm361, %v360, 7
      %v363 = vmul.u32 %v362, 64
      %v364 = vmul.u32 %v362, 8
      %v365 = vrot.slane %v364, 1
      %v366 = vadd.s32 %v363, %v365
      %v367 = vrot.slane %v362, 2
      %v368 = vadd.s32 %v366, %v367
      %vm369 = vcmask 18448
      %v370 = vsel %vm369, %v270, 0.0
      %v371 = vrot.slane %v370, 4
      %v372 = vadd.f32 %v370, %v371
      %v373 = vrot.slane %v372, 2
      %v374 = vadd.f32 %v372, %v373
      %v375 = vrot.slane %v374, 1
      %v376 = vadd.f32 %v374, %v375
      %v377 = vrcp.pop %v376
      %378 = vset.pattern.permute.xlu0 2
      %379 = vperm.xlu0 %378, %v266
      %v380 = vpop.permute.xlu0 %379
      %v382 = vmul.f32 %v267, %v380
      %v383 = vsel %vm286, %v382, 0.0
      %v384 = vrot.slane %v383, 4
      %v385 = vadd.f32 %v383, %v384
      %v386 = vrot.slane %v385, 2
      %v387 = vadd.f32 %v385, %v386
      %v388 = vrot.slane %v387, 1
      %v389 = vadd.f32 %v387, %v388
      %v390 = vadd.f32 %v389, %v380
      %392 = vset.pattern.permute.xlu0 2
      %393 = vperm.xlu0 %392, %v377
      %v394 = vpop.permute.xlu0 %393
      %v396 = vmul.f32 %v390, %v394
      %v397 = vmul.f32 %v396, 2.0
      %v398 = vlaneseq
      %v399 = vshrl.u32 %v398, 7
      %v400 = vsub.s32 3, %v399
      %v401 = vrot.slane %v397, %v400
      %v402 = vmul.f32 %v401, %v380
      %v403 = vsub.f32 %v267, %v402
      %v404 = vadd.f32 %v403, 0.5
      %v405 = vmul.f32 %v404, 8.0
      %v406 = vcvt.f32.s32.to.zero.pseudo %v405
      %vm407 = vcmp.gt.s32.totalorder %v406, 0
      %v408 = vsel %vm407, %v406, 0
      %vm409 = vcmp.lt.s32.totalorder %v408, 7
      %v410 = vsel %vm409, %v408, 7
      %v411 = vmul.u32 %v410, 64
      %v412 = vmul.u32 %v410, 8
      %v413 = vrot.slane %v412, 1
      %v414 = vadd.s32 %v411, %v413
      %v415 = vrot.slane %v410, 2
      %v416 = vadd.s32 %v414, %v415
      %417 = vrot.lane.b32.xlu0 %v368, 64
      %v418 = vpop.permute.xlu0 %417
      %vm419 = vcmask 523264
      %v420 = vsel %vm419, %v320, %v418
      %422 = vrot.lane.b32.xlu0 %v355, 64
      %v423 = vpop.permute.xlu0 %422
      %v425 = vsel %vm419, %v307, %v423
      %v426 = vlaneseq
      %v427 = vshrl.u32 %v426, 7
      %v428 = vsub.s32 0, %v427
      %v429 = vrot.slane %v420, %v428
      %v430 = vlaneseq
      %v431 = vshrl.u32 %v430, 7
      %v432 = vsub.s32 0, %v431
      %v433 = vrot.slane %v416, %v432
      %vm434 = vcmp.eq.s32.totalorder %v202, %v429
      %vm435 = vcmp.eq.s32.totalorder %v202, %v433
      %vm436 = vcmp.eq.s32.totalorder %v203, %v429
      %vm437 = vcmp.eq.s32.totalorder %v203, %v433
      %vm438 = vcmp.eq.s32.totalorder %v204, %v429
      %vm439 = vcmp.eq.s32.totalorder %v204, %v433
      %vm440 = vcmp.eq.s32.totalorder %v205, %v429
      %vm441 = vcmp.eq.s32.totalorder %v205, %v433
      %vm442 = vcmp.eq.s32.totalorder %v206, %v429
      %vm443 = vcmp.eq.s32.totalorder %v206, %v433
      %vm444 = vcmp.eq.s32.totalorder %v207, %v429
      %vm445 = vcmp.eq.s32.totalorder %v207, %v433
      %vm446 = vcmp.eq.s32.totalorder %v208, %v429
      %vm447 = vcmp.eq.s32.totalorder %v208, %v433
      %vm448 = vcmp.eq.s32.totalorder %v209, %v429
      %vm449 = vcmp.eq.s32.totalorder %v209, %v433
      %vm450 = vcmp.eq.s32.totalorder %v210, %v429
      %vm451 = vcmp.eq.s32.totalorder %v210, %v433
      %vm452 = vcmp.eq.s32.totalorder %v211, %v429
      %vm453 = vcmp.eq.s32.totalorder %v211, %v433
      %vm454 = vcmp.eq.s32.totalorder %v212, %v429
      %vm455 = vcmp.eq.s32.totalorder %v212, %v433
      %vm456 = vcmp.eq.s32.totalorder %v213, %v429
      %vm457 = vcmp.eq.s32.totalorder %v213, %v433
      %vm458 = vcmp.eq.s32.totalorder %v214, %v429
      %vm459 = vcmp.eq.s32.totalorder %v214, %v433
      %vm460 = vcmp.eq.s32.totalorder %v215, %v429
      %vm461 = vcmp.eq.s32.totalorder %v215, %v433
      %vm462 = vcmp.eq.s32.totalorder %v216, %v429
      %vm463 = vcmp.eq.s32.totalorder %v216, %v433
      %vm464 = vcmp.eq.s32.totalorder %v217, %v429
      %vm465 = vcmp.eq.s32.totalorder %v217, %v433
      %vm466 = vcmp.eq.s32.totalorder %v218, %v429
      %vm467 = vcmp.eq.s32.totalorder %v218, %v433
      %vm468 = vcmp.eq.s32.totalorder %v219, %v429
      %vm469 = vcmp.eq.s32.totalorder %v219, %v433
      %vm470 = vcmp.eq.s32.totalorder %v220, %v429
      %vm471 = vcmp.eq.s32.totalorder %v220, %v433
      %vm472 = vcmp.eq.s32.totalorder %v221, %v429
      %vm473 = vcmp.eq.s32.totalorder %v221, %v433
      %vm474 = vcmp.eq.s32.totalorder %v222, %v429
      %vm475 = vcmp.eq.s32.totalorder %v222, %v433
      %vm476 = vcmp.eq.s32.totalorder %v223, %v429
      %vm477 = vcmp.eq.s32.totalorder %v223, %v433
      %vm478 = vcmp.eq.s32.totalorder %v224, %v429
      %vm479 = vcmp.eq.s32.totalorder %v224, %v433
      %vm480 = vcmp.eq.s32.totalorder %v225, %v429
      %vm481 = vcmp.eq.s32.totalorder %v225, %v433
      %vm482 = vcmp.eq.s32.totalorder %v226, %v429
      %vm483 = vcmp.eq.s32.totalorder %v226, %v433
      %vm484 = vcmp.eq.s32.totalorder %v227, %v429
      %vm485 = vcmp.eq.s32.totalorder %v227, %v433
      %vm486 = vcmp.eq.s32.totalorder %v228, %v429
      %vm487 = vcmp.eq.s32.totalorder %v228, %v433
      %vm488 = vcmp.eq.s32.totalorder %v229, %v429
      %vm489 = vcmp.eq.s32.totalorder %v229, %v433
      %vm490 = vcmp.eq.s32.totalorder %v230, %v429
      %vm491 = vcmp.eq.s32.totalorder %v230, %v433
      %vm492 = vcmp.eq.s32.totalorder %v231, %v429
      %vm493 = vcmp.eq.s32.totalorder %v231, %v433
      %vm494 = vcmp.eq.s32.totalorder %v232, %v429
      %vm495 = vcmp.eq.s32.totalorder %v232, %v433
      %vm496 = vcmp.eq.s32.totalorder %v233, %v429
      %vm497 = vcmp.eq.s32.totalorder %v233, %v433
      %vm498 = vcmp.eq.s32.totalorder %v234, %v429
      %vm499 = vcmp.eq.s32.totalorder %v234, %v433
      %vm500 = vcmp.eq.s32.totalorder %v235, %v429
      %vm501 = vcmp.eq.s32.totalorder %v235, %v433
      %vm502 = vcmp.eq.s32.totalorder %v236, %v429
      %vm503 = vcmp.eq.s32.totalorder %v236, %v433
      %vm504 = vcmp.eq.s32.totalorder %v237, %v429
      %vm505 = vcmp.eq.s32.totalorder %v237, %v433
      %vm506 = vcmp.eq.s32.totalorder %v238, %v429
      %vm507 = vcmp.eq.s32.totalorder %v238, %v433
      %vm508 = vcmp.eq.s32.totalorder %v239, %v429
      %vm509 = vcmp.eq.s32.totalorder %v239, %v433
      %vm510 = vcmp.eq.s32.totalorder %v240, %v429
      %vm511 = vcmp.eq.s32.totalorder %v240, %v433
      %vm512 = vcmp.eq.s32.totalorder %v241, %v429
      %vm513 = vcmp.eq.s32.totalorder %v241, %v433
      %vm514 = vcmp.eq.s32.totalorder %v242, %v429
      %vm515 = vcmp.eq.s32.totalorder %v242, %v433
      %vm516 = vcmp.eq.s32.totalorder %v243, %v429
      %vm517 = vcmp.eq.s32.totalorder %v243, %v433
      %vm518 = vcmp.eq.s32.totalorder %v244, %v429
      %vm519 = vcmp.eq.s32.totalorder %v244, %v433
      %vm520 = vcmp.eq.s32.totalorder %v245, %v429
      %vm521 = vcmp.eq.s32.totalorder %v245, %v433
      %vm522 = vcmp.eq.s32.totalorder %v246, %v429
      %vm523 = vcmp.eq.s32.totalorder %v246, %v433
      %vm524 = vcmp.eq.s32.totalorder %v247, %v429
      %vm525 = vcmp.eq.s32.totalorder %v247, %v433
      %vm526 = vcmp.eq.s32.totalorder %v248, %v429
      %vm527 = vcmp.eq.s32.totalorder %v248, %v433
      %vm528 = vcmp.eq.s32.totalorder %v249, %v429
      %vm529 = vcmp.eq.s32.totalorder %v249, %v433
      %vm530 = vcmp.eq.s32.totalorder %v250, %v429
      %vm531 = vcmp.eq.s32.totalorder %v250, %v433
      %vm532 = vcmp.eq.s32.totalorder %v251, %v429
      %vm533 = vcmp.eq.s32.totalorder %v251, %v433
      %vm534 = vcmp.eq.s32.totalorder %v252, %v429
      %vm535 = vcmp.eq.s32.totalorder %v252, %v433
      %vm536 = vcmp.eq.s32.totalorder %v253, %v429
      %vm537 = vcmp.eq.s32.totalorder %v253, %v433
      %vm538 = vcmp.eq.s32.totalorder %v254, %v429
      %vm539 = vcmp.eq.s32.totalorder %v254, %v433
      %vm540 = vcmp.eq.s32.totalorder %v255, %v429
      %vm541 = vcmp.eq.s32.totalorder %v255, %v433
      %vm542 = vcmp.eq.s32.totalorder %v256, %v429
      %vm543 = vcmp.eq.s32.totalorder %v256, %v433
      %vm544 = vcmp.eq.s32.totalorder %v257, %v429
      %vm545 = vcmp.eq.s32.totalorder %v257, %v433
      %vm546 = vcmp.eq.s32.totalorder %v258, %v429
      %vm547 = vcmp.eq.s32.totalorder %v258, %v433
      %vm548 = vcmp.eq.s32.totalorder %v259, %v429
      %vm549 = vcmp.eq.s32.totalorder %v259, %v433
      %vm550 = vcmp.eq.s32.totalorder %v260, %v429
      %vm551 = vcmp.eq.s32.totalorder %v260, %v433
      %vm552 = vcmp.eq.s32.totalorder %v261, %v429
      %vm553 = vcmp.eq.s32.totalorder %v261, %v433
      %vm554 = vcmp.eq.s32.totalorder %v262, %v429
      %vm555 = vcmp.eq.s32.totalorder %v262, %v433
      %vm556 = vcmp.eq.s32.totalorder %v263, %v429
      %vm557 = vcmp.eq.s32.totalorder %v263, %v433
      %vm558 = vcmp.eq.s32.totalorder %v264, %v429
      %vm559 = vcmp.eq.s32.totalorder %v264, %v433
      %vm560 = vcmp.eq.s32.totalorder %v265, %v429
      %vm561 = vcmp.eq.s32.totalorder %v265, %v433
      %v562 = vsel %vm434, 1, 0
      %v563 = vsel %vm435, 1, 0
      %v564 = vsel %vm436, 1, 0
      %v565 = vsel %vm437, 1, 0
      %v566 = vsel %vm438, 1, 0
      %v567 = vsel %vm439, 1, 0
      %v568 = vsel %vm440, 1, 0
      %v569 = vsel %vm441, 1, 0
      %v570 = vsel %vm442, 1, 0
      %v571 = vsel %vm443, 1, 0
      %v572 = vsel %vm444, 1, 0
      %v573 = vsel %vm445, 1, 0
      %v574 = vsel %vm446, 1, 0
      %v575 = vsel %vm447, 1, 0
      %v576 = vsel %vm448, 1, 0
      %v577 = vsel %vm449, 1, 0
      %v578 = vsel %vm450, 1, 0
      %v579 = vsel %vm451, 1, 0
      %v580 = vsel %vm452, 1, 0
      %v581 = vsel %vm453, 1, 0
      %v582 = vsel %vm454, 1, 0
      %v583 = vsel %vm455, 1, 0
      %v584 = vsel %vm456, 1, 0
      %v585 = vsel %vm457, 1, 0
      %v586 = vsel %vm458, 1, 0
      %v587 = vsel %vm459, 1, 0
      %v588 = vsel %vm460, 1, 0
      %v589 = vsel %vm461, 1, 0
      %v590 = vsel %vm462, 1, 0
      %v591 = vsel %vm463, 1, 0
      %v592 = vsel %vm464, 1, 0
      %v593 = vsel %vm465, 1, 0
      %v594 = vsel %vm466, 1, 0
      %v595 = vsel %vm467, 1, 0
      %v596 = vsel %vm468, 1, 0
      %v597 = vsel %vm469, 1, 0
      %v598 = vsel %vm470, 1, 0
      %v599 = vsel %vm471, 1, 0
      %v600 = vsel %vm472, 1, 0
      %v601 = vsel %vm473, 1, 0
      %v602 = vsel %vm474, 1, 0
      %v603 = vsel %vm475, 1, 0
      %v604 = vsel %vm476, 1, 0
      %v605 = vsel %vm477, 1, 0
      %v606 = vsel %vm478, 1, 0
      %v607 = vsel %vm479, 1, 0
      %v608 = vsel %vm480, 1, 0
      %v609 = vsel %vm481, 1, 0
      %v610 = vsel %vm482, 1, 0
      %v611 = vsel %vm483, 1, 0
      %v612 = vsel %vm484, 1, 0
      %v613 = vsel %vm485, 1, 0
      %v614 = vsel %vm486, 1, 0
      %v615 = vsel %vm487, 1, 0
      %v616 = vsel %vm488, 1, 0
      %v617 = vsel %vm489, 1, 0
      %v618 = vsel %vm490, 1, 0
      %v619 = vsel %vm491, 1, 0
      %v620 = vsel %vm492, 1, 0
      %v621 = vsel %vm493, 1, 0
      %v622 = vsel %vm494, 1, 0
      %v623 = vsel %vm495, 1, 0
      %v624 = vsel %vm496, 1, 0
      %v625 = vsel %vm497, 1, 0
      %v626 = vsel %vm498, 1, 0
      %v627 = vsel %vm499, 1, 0
      %v628 = vsel %vm500, 1, 0
      %v629 = vsel %vm501, 1, 0
      %v630 = vsel %vm502, 1, 0
      %v631 = vsel %vm503, 1, 0
      %v632 = vsel %vm504, 1, 0
      %v633 = vsel %vm505, 1, 0
      %v634 = vsel %vm506, 1, 0
      %v635 = vsel %vm507, 1, 0
      %v636 = vsel %vm508, 1, 0
      %v637 = vsel %vm509, 1, 0
      %v638 = vsel %vm510, 1, 0
      %v639 = vsel %vm511, 1, 0
      %v640 = vsel %vm512, 1, 0
      %v641 = vsel %vm513, 1, 0
      %v642 = vsel %vm514, 1, 0
      %v643 = vsel %vm515, 1, 0
      %v644 = vsel %vm516, 1, 0
      %v645 = vsel %vm517, 1, 0
      %v646 = vsel %vm518, 1, 0
      %v647 = vsel %vm519, 1, 0
      %v648 = vsel %vm520, 1, 0
      %v649 = vsel %vm521, 1, 0
      %v650 = vsel %vm522, 1, 0
      %v651 = vsel %vm523, 1, 0
      %v652 = vsel %vm524, 1, 0
      %v653 = vsel %vm525, 1, 0
      %v654 = vsel %vm526, 1, 0
      %v655 = vsel %vm527, 1, 0
      %v656 = vsel %vm528, 1, 0
      %v657 = vsel %vm529, 1, 0
      %v658 = vsel %vm530, 1, 0
      %v659 = vsel %vm531, 1, 0
      %v660 = vsel %vm532, 1, 0
      %v661 = vsel %vm533, 1, 0
      %v662 = vsel %vm534, 1, 0
      %v663 = vsel %vm535, 1, 0
      %v664 = vsel %vm536, 1, 0
      %v665 = vsel %vm537, 1, 0
      %v666 = vsel %vm538, 1, 0
      %v667 = vsel %vm539, 1, 0
      %v668 = vsel %vm540, 1, 0
      %v669 = vsel %vm541, 1, 0
      %v670 = vsel %vm542, 1, 0
      %v671 = vsel %vm543, 1, 0
      %v672 = vsel %vm544, 1, 0
      %v673 = vsel %vm545, 1, 0
      %v674 = vsel %vm546, 1, 0
      %v675 = vsel %vm547, 1, 0
      %v676 = vsel %vm548, 1, 0
      %v677 = vsel %vm549, 1, 0
      %v678 = vsel %vm550, 1, 0
      %v679 = vsel %vm551, 1, 0
      %v680 = vsel %vm552, 1, 0
      %v681 = vsel %vm553, 1, 0
      %v682 = vsel %vm554, 1, 0
      %v683 = vsel %vm555, 1, 0
      %v684 = vsel %vm556, 1, 0
      %v685 = vsel %vm557, 1, 0
      %v686 = vsel %vm558, 1, 0
      %v687 = vsel %vm559, 1, 0
      %v688 = vsel %vm560, 1, 0
      %v689 = vsel %vm561, 1, 0
      %v690 = vcvt.s32.f32 %v562
      %v691 = vcvt.s32.f32 %v563
      %v692 = vcvt.s32.f32 %v564
      %v693 = vcvt.s32.f32 %v565
      %v694 = vcvt.s32.f32 %v566
      %v695 = vcvt.s32.f32 %v567
      %v696 = vcvt.s32.f32 %v568
      %v697 = vcvt.s32.f32 %v569
      %v698 = vcvt.s32.f32 %v570
      %v699 = vcvt.s32.f32 %v571
      %v700 = vcvt.s32.f32 %v572
      %v701 = vcvt.s32.f32 %v573
      %v702 = vcvt.s32.f32 %v574
      %v703 = vcvt.s32.f32 %v575
      %v704 = vcvt.s32.f32 %v576
      %v705 = vcvt.s32.f32 %v577
      %v706 = vcvt.s32.f32 %v578
      %v707 = vcvt.s32.f32 %v579
      %v708 = vcvt.s32.f32 %v580
      %v709 = vcvt.s32.f32 %v581
      %v710 = vcvt.s32.f32 %v582
      %v711 = vcvt.s32.f32 %v583
      %v712 = vcvt.s32.f32 %v584
      %v713 = vcvt.s32.f32 %v585
      %v714 = vcvt.s32.f32 %v586
      %v715 = vcvt.s32.f32 %v587
      %v716 = vcvt.s32.f32 %v588
      %v717 = vcvt.s32.f32 %v589
      %v718 = vcvt.s32.f32 %v590
      %v719 = vcvt.s32.f32 %v591
      %v720 = vcvt.s32.f32 %v592
      %v721 = vcvt.s32.f32 %v593
      %v722 = vcvt.s32.f32 %v594
      %v723 = vcvt.s32.f32 %v595
      %v724 = vcvt.s32.f32 %v596
      %v725 = vcvt.s32.f32 %v597
      %v726 = vcvt.s32.f32 %v598
      %v727 = vcvt.s32.f32 %v599
      %v728 = vcvt.s32.f32 %v600
      %v729 = vcvt.s32.f32 %v601
      %v730 = vcvt.s32.f32 %v602
      %v731 = vcvt.s32.f32 %v603
      %v732 = vcvt.s32.f32 %v604
      %v733 = vcvt.s32.f32 %v605
      %v734 = vcvt.s32.f32 %v606
      %v735 = vcvt.s32.f32 %v607
      %v736 = vcvt.s32.f32 %v608
      %v737 = vcvt.s32.f32 %v609
      %v738 = vcvt.s32.f32 %v610
      %v739 = vcvt.s32.f32 %v611
      %v740 = vcvt.s32.f32 %v612
      %v741 = vcvt.s32.f32 %v613
      %v742 = vcvt.s32.f32 %v614
      %v743 = vcvt.s32.f32 %v615
      %v744 = vcvt.s32.f32 %v616
      %v745 = vcvt.s32.f32 %v617
      %v746 = vcvt.s32.f32 %v618
      %v747 = vcvt.s32.f32 %v619
      %v748 = vcvt.s32.f32 %v620
      %v749 = vcvt.s32.f32 %v621
      %v750 = vcvt.s32.f32 %v622
      %v751 = vcvt.s32.f32 %v623
      %v752 = vcvt.s32.f32 %v624
      %v753 = vcvt.s32.f32 %v625
      %v754 = vcvt.s32.f32 %v626
      %v755 = vcvt.s32.f32 %v627
      %v756 = vcvt.s32.f32 %v628
      %v757 = vcvt.s32.f32 %v629
      %v758 = vcvt.s32.f32 %v630
      %v759 = vcvt.s32.f32 %v631
      %v760 = vcvt.s32.f32 %v632
      %v761 = vcvt.s32.f32 %v633
      %v762 = vcvt.s32.f32 %v634
      %v763 = vcvt.s32.f32 %v635
      %v764 = vcvt.s32.f32 %v636
      %v765 = vcvt.s32.f32 %v637
      %v766 = vcvt.s32.f32 %v638
      %v767 = vcvt.s32.f32 %v639
      %v768 = vcvt.s32.f32 %v640
      %v769 = vcvt.s32.f32 %v641
      %v770 = vcvt.s32.f32 %v642
      %v771 = vcvt.s32.f32 %v643
      %v772 = vcvt.s32.f32 %v644
      %v773 = vcvt.s32.f32 %v645
      %v774 = vcvt.s32.f32 %v646
      %v775 = vcvt.s32.f32 %v647
      %v776 = vcvt.s32.f32 %v648
      %v777 = vcvt.s32.f32 %v649
      %v778 = vcvt.s32.f32 %v650
      %v779 = vcvt.s32.f32 %v651
      %v780 = vcvt.s32.f32 %v652
      %v781 = vcvt.s32.f32 %v653
      %v782 = vcvt.s32.f32 %v654
      %v783 = vcvt.s32.f32 %v655
      %v784 = vcvt.s32.f32 %v656
      %v785 = vcvt.s32.f32 %v657
      %v786 = vcvt.s32.f32 %v658
      %v787 = vcvt.s32.f32 %v659
      %v788 = vcvt.s32.f32 %v660
      %v789 = vcvt.s32.f32 %v661
      %v790 = vcvt.s32.f32 %v662
      %v791 = vcvt.s32.f32 %v663
      %v792 = vcvt.s32.f32 %v664
      %v793 = vcvt.s32.f32 %v665
      %v794 = vcvt.s32.f32 %v666
      %v795 = vcvt.s32.f32 %v667
      %v796 = vcvt.s32.f32 %v668
      %v797 = vcvt.s32.f32 %v669
      %v798 = vcvt.s32.f32 %v670
      %v799 = vcvt.s32.f32 %v671
      %v800 = vcvt.s32.f32 %v672
      %v801 = vcvt.s32.f32 %v673
      %v802 = vcvt.s32.f32 %v674
      %v803 = vcvt.s32.f32 %v675
      %v804 = vcvt.s32.f32 %v676
      %v805 = vcvt.s32.f32 %v677
      %v806 = vcvt.s32.f32 %v678
      %v807 = vcvt.s32.f32 %v679
      %v808 = vcvt.s32.f32 %v680
      %v809 = vcvt.s32.f32 %v681
      %v810 = vcvt.s32.f32 %v682
      %v811 = vcvt.s32.f32 %v683
      %v812 = vcvt.s32.f32 %v684
      %v813 = vcvt.s32.f32 %v685
      %v814 = vcvt.s32.f32 %v686
      %v815 = vcvt.s32.f32 %v687
      %v816 = vcvt.s32.f32 %v688
      %v817 = vcvt.s32.f32 %v689
      %v820 = vcombine.high %v268, %v268
      %v821 = vcombine.high %v269, %v269
      %824 = vmatprep.subr.mxu0 %v691
      %825 = vmatpush1.msra.mxu0 %v690
      %826 = vmatprep.subr.mxu0 %v693
      %827 = vmatpush1.msra.mxu0 %v692
      %828 = vmatprep.subr.mxu0 %v695
      %829 = vmatpush1.msra.mxu0 %v694
      %830 = vmatprep.subr.mxu0 %v697
      %831 = vmatpush1.msra.mxu0 %v696
      %832 = vmatprep.subr.mxu0 %v699
      %833 = vmatpush1.msra.mxu0 %v698
      %834 = vmatprep.subr.mxu0 %v701
      %835 = vmatpush1.msra.mxu0 %v700
      %836 = vmatprep.subr.mxu0 %v703
      %837 = vmatpush1.msra.mxu0 %v702
      %838 = vmatprep.subr.mxu0 %v705
      %839 = vmatpush1.msra.mxu0 %v704
      %840 = vmatprep.subr.mxu0 %v707
      %841 = vmatpush1.msra.mxu0 %v706
      %842 = vmatprep.subr.mxu0 %v709
      %843 = vmatpush1.msra.mxu0 %v708
      %844 = vmatprep.subr.mxu0 %v711
      %845 = vmatpush1.msra.mxu0 %v710
      %846 = vmatprep.subr.mxu0 %v713
      %847 = vmatpush1.msra.mxu0 %v712
      %848 = vmatprep.subr.mxu0 %v715
      %849 = vmatpush1.msra.mxu0 %v714
      %850 = vmatprep.subr.mxu0 %v717
      %851 = vmatpush1.msra.mxu0 %v716
      %852 = vmatprep.subr.mxu0 %v719
      %853 = vmatpush1.msra.mxu0 %v718
      %854 = vmatprep.subr.mxu0 %v721
      %855 = vmatpush1.msra.mxu0 %v720
      %856 = vmatprep.subr.mxu0 %v723
      %857 = vmatpush1.msra.mxu0 %v722
      %858 = vmatprep.subr.mxu0 %v725
      %859 = vmatpush1.msra.mxu0 %v724
      %860 = vmatprep.subr.mxu0 %v727
      %861 = vmatpush1.msra.mxu0 %v726
      %862 = vmatprep.subr.mxu0 %v729
      %863 = vmatpush1.msra.mxu0 %v728
      %864 = vmatprep.subr.mxu0 %v731
      %865 = vmatpush1.msra.mxu0 %v730
      %866 = vmatprep.subr.mxu0 %v733
      %867 = vmatpush1.msra.mxu0 %v732
      %868 = vmatprep.subr.mxu0 %v735
      %869 = vmatpush1.msra.mxu0 %v734
      %870 = vmatprep.subr.mxu0 %v737
      %871 = vmatpush1.msra.mxu0 %v736
      %872 = vmatprep.subr.mxu0 %v739
      %873 = vmatpush1.msra.mxu0 %v738
      %874 = vmatprep.subr.mxu0 %v741
      %875 = vmatpush1.msra.mxu0 %v740
      %876 = vmatprep.subr.mxu0 %v743
      %877 = vmatpush1.msra.mxu0 %v742
      %878 = vmatprep.subr.mxu0 %v745
      %879 = vmatpush1.msra.mxu0 %v744
      %880 = vmatprep.subr.mxu0 %v747
      %881 = vmatpush1.msra.mxu0 %v746
      %882 = vmatprep.subr.mxu0 %v749
      %883 = vmatpush1.msra.mxu0 %v748
      %884 = vmatprep.subr.mxu0 %v751
      %885 = vmatpush1.msra.mxu0 %v750
      %886 = vmatprep.subr.mxu0 %v753
      %887 = vmatpush1.msra.mxu0 %v752
      %888 = vmatprep.mubr.f32.mxu0 %v820
      %889 = vmatmul.mubr.f32.gmra.mrb[0].mxu0 %v268
      %v890 = vpop.f32.mrb[0].mxu0
      %v891 = vadd.f32 0.0, %v890
      %v892 = vpop.f32.mrb[0].mxu0
      %v893 = vadd.f32 0.0, %v892
      %894 = vdwg.mxu0
      %895 = vmatprep.subr.mxu0 %v755
      %896 = vmatpush1.msra.mxu0 %v754
      %897 = vmatprep.subr.mxu0 %v757
      %898 = vmatpush1.msra.mxu0 %v756
      %899 = vmatprep.subr.mxu0 %v759
      %900 = vmatpush1.msra.mxu0 %v758
      %901 = vmatprep.subr.mxu0 %v761
      %902 = vmatpush1.msra.mxu0 %v760
      %903 = vmatprep.subr.mxu0 %v763
      %904 = vmatpush1.msra.mxu0 %v762
      %905 = vmatprep.subr.mxu0 %v765
      %906 = vmatpush1.msra.mxu0 %v764
      %907 = vmatprep.subr.mxu0 %v767
      %908 = vmatpush1.msra.mxu0 %v766
      %909 = vmatprep.subr.mxu0 %v769
      %910 = vmatpush1.msra.mxu0 %v768
      %911 = vmatprep.subr.mxu0 %v771
      %912 = vmatpush1.msra.mxu0 %v770
      %913 = vmatprep.subr.mxu0 %v773
      %914 = vmatpush1.msra.mxu0 %v772
      %915 = vmatprep.subr.mxu0 %v775
      %916 = vmatpush1.msra.mxu0 %v774
      %917 = vmatprep.subr.mxu0 %v777
      %918 = vmatpush1.msra.mxu0 %v776
      %919 = vmatprep.subr.mxu0 %v779
      %920 = vmatpush1.msra.mxu0 %v778
      %921 = vmatprep.subr.mxu0 %v781
      %922 = vmatpush1.msra.mxu0 %v780
      %923 = vmatprep.subr.mxu0 %v783
      %924 = vmatpush1.msra.mxu0 %v782
      %925 = vmatprep.subr.mxu0 %v785
      %926 = vmatpush1.msra.mxu0 %v784
      %927 = vmatprep.subr.mxu0 %v787
      %928 = vmatpush1.msra.mxu0 %v786
      %929 = vmatprep.subr.mxu0 %v789
      %930 = vmatpush1.msra.mxu0 %v788
      %931 = vmatprep.subr.mxu0 %v791
      %932 = vmatpush1.msra.mxu0 %v790
      %933 = vmatprep.subr.mxu0 %v793
      %934 = vmatpush1.msra.mxu0 %v792
      %935 = vmatprep.subr.mxu0 %v795
      %936 = vmatpush1.msra.mxu0 %v794
      %937 = vmatprep.subr.mxu0 %v797
      %938 = vmatpush1.msra.mxu0 %v796
      %939 = vmatprep.subr.mxu0 %v799
      %940 = vmatpush1.msra.mxu0 %v798
      %941 = vmatprep.subr.mxu0 %v801
      %942 = vmatpush1.msra.mxu0 %v800
      %943 = vmatprep.subr.mxu0 %v803
      %944 = vmatpush1.msra.mxu0 %v802
      %945 = vmatprep.subr.mxu0 %v805
      %946 = vmatpush1.msra.mxu0 %v804
      %947 = vmatprep.subr.mxu0 %v807
      %948 = vmatpush1.msra.mxu0 %v806
      %949 = vmatprep.subr.mxu0 %v809
      %950 = vmatpush1.msra.mxu0 %v808
      %951 = vmatprep.subr.mxu0 %v811
      %952 = vmatpush1.msra.mxu0 %v810
      %953 = vmatprep.subr.mxu0 %v813
      %954 = vmatpush1.msra.mxu0 %v812
      %955 = vmatprep.subr.mxu0 %v815
      %956 = vmatpush1.msra.mxu0 %v814
      %957 = vmatprep.subr.mxu0 %v817
      %958 = vmatpush1.msra.mxu0 %v816
      %959 = vmatprep.mubr.f32.mxu0 %v821
      %960 = vmatmul.mubr.f32.gmra.mrb[0].mxu0 %v269
      %v961 = vpop.f32.mrb[0].mxu0
      %v962 = vadd.f32 %v891, %v961
      %v963 = vpop.f32.mrb[0].mxu0
      %v964 = vadd.f32 %v893, %v963
      %965 = vdwg.mxu0
      %v966 = vsub.f32 %v425, %v962
      %v967 = vsub.f32 %v403, %v964
      %v968 = vadd.f32 %v966, 1e-06
      %v969 = vadd.f32 %v967, 1e-06
      %v970 = vmul.f32 %v968, %v968
      %v971 = vmul.f32 %v969, %v969
      %vm972 = vcmask 1042432
      %v973 = vsel %vm972, %v970, 0.0
      %v974 = vrot.slane %v973, 4
      %v975 = vadd.f32 %v973, %v974
      %v976 = vrot.slane %v975, 2
      %v977 = vadd.f32 %v975, %v976
      %v978 = vrot.slane %v977, 1
      %v979 = vadd.f32 %v977, %v978
      %v980 = vsel %vm286, %v971, 0.0
      %v981 = vrot.slane %v980, 4
      %v982 = vadd.f32 %v980, %v981
      %v983 = vrot.slane %v982, 2
      %v984 = vadd.f32 %v982, %v983
      %v985 = vrot.slane %v984, 1
      %v986 = vadd.f32 %v984, %v985
      %v987 = vrsqrt.pop %v979
      %v988 = vmul.f32 %v979, %v987
      %vm989 = vcmp.eq.f32.partialorder %v979, inf
      %v990 = vsel %vm989, %v979, %v988
      %vm991 = vcmp.eq.f32.partialorder %v979, 0.0
      %v992 = vand.u32 %v979, 2147483648
      %v993 = vsel %vm991, %v992, %v990
      %v994 = vrsqrt.pop %v986
      %v995 = vmul.f32 %v986, %v994
      %vm996 = vcmp.eq.f32.partialorder %v986, inf
      %v997 = vsel %vm996, %v986, %v995
      %vm998 = vcmp.eq.f32.partialorder %v986, 0.0
      %v999 = vand.u32 %v986, 2147483648
      %v1000 = vsel %vm998, %v999, %v997
      %v1001 = vsub.f32 1.0, %v962
      %v1002 = vsub.f32 1.0, %v964
      %v1003 = vmul.f32 %v993, %v1001
      %v1004 = vmul.f32 %v1000, %v1002
      %v1005 = vadd.f32 %v1003, 0.0
      %v1006 = vadd.f32 %v1004, 0.0
      %vm1007 = vcmask 1043459
      %v1008 = vsel %vm1007, %v1005, 0.0
      %vm1009 = vcmask 519171
      %v1010 = vsel %vm1009, %v1006, 0.0
      %v1011 = vadd.f32 %v1008, %v1010
      %1012 = vadd.xlane.f32.xlu0 %v1011
      %v1013 = vpop.xlane.xlu0 %1012
      %vm1014 = vcmask 3075
      %1015 = vst.msk [vmem:[%s200 - $0x3] sm:$0x8] %vm1014, %v1013
      %p1016 = scmp.lt.s32.totalorder %s14, 1
      %s1017 = scalar_select %p1016, %s14, 1
      %s1018 = scalar_lea.vmem %s3, %s1017
      // Predicated region
      $region33: #{tpu_custom_call.1} parent=31 // pred_check
        %p1019 = pneg %p110
      $region34: #{tpu_custom_call.1} parent=31 // pred_check_branch
        %1021 = sbr.rel (%p1019) target = $region36
      $region35: #{tpu_custom_call.1} parent=31 // pred_region
        _
      $region36: #{tpu_custom_call.1} parent=31 // pred_fallthru
        _
    $region32: #{tpu_custom_call.1} parent=5 // pred_fallthru
      _
    %p1022 = scmp.le.s32.totalorder 2, %s9
    // Predicated region
    $region37: #{tpu_custom_call.1} parent=5 // pred_check
      %p1023 = pneg %p1022
    $region38: #{tpu_custom_call.1} parent=5 // pred_check_branch
      %1025 = sbr.rel (%p1023) target = $region40
    $region39: #{tpu_custom_call.1} parent=5 // pred_region
      %s1026 = ssub.s32 %s9, 2
      // Predicated region
      $region41: #{tpu_custom_call.1} parent=39 // pred_check
        %p1027 = pneg %p116
      $region42: #{tpu_custom_call.1} parent=39 // pred_check_branch
        %1029 = sbr.rel (%p1027) target = $region44
      $region43: #{tpu_custom_call.1} parent=39 // pred_region
        %p1030 = scmp.lt.s32.totalorder %s15, 1
        %s1031 = scalar_select %p1030, %s15, 1
        %s1032 = scalar_lea.vmem %s3, %s1031
      $region44: #{tpu_custom_call.1} parent=39 // pred_fallthru
        _
    $region40: #{tpu_custom_call.1} parent=5 // pred_fallthru
      _
  $region6: #{tpu_custom_call.1} parent=0 // loop_footer
    %s13 = sadd.s32 1, %s9
  $region7: #{tpu_custom_call.1} parent=0 // loop_footer_branch
    %8 = sbr.rel target = $region3
  $region8: #{tpu_custom_call.1} parent=0 // loop_exit
    _

</llo_original>
